<compile_context>
chip_gen: v6e
topology: v6e:2x2x1
jax: 0.10.0
libtpu: 0.0.40
codegen_flags: <defaults>
</compile_context>

<pallas_src>
import functools

import jax
import jax.numpy as jnp
from jax.experimental import pallas as pl
from jax.experimental.pallas import tpu as pltpu


_NSTATS = 8
_LANE = 128


def _input_vmem_budget():
    """Bytes allowed for the double-buffered input blocks (per-generation)."""
    try:
        cap = int(pltpu.get_tpu_info().vmem_capacity_bytes)
    except Exception:  # conservative fallback (v7x has 64 MiB per TC)
        cap = 64 << 20
    return max(8 << 20, min(cap // 2, 48 << 20))


def _choose_tile_n(B, N, x_bytes, t_bytes):
    """Pick (tile_n, n_chunks): large lane-aligned chunks that fit VMEM,
    with >= 2 chunks when N allows so v7x can shard the chunk axis."""
    budget = _input_vmem_budget()
    per_lane = 2 * B * (x_bytes + t_bytes)          # double-buffered logits + targets
    cap = max(_LANE, (budget // max(per_lane, 1)) // _LANE * _LANE)
    min_chunks = 2 if N >= 2 * _LANE else 1
    want = pl.cdiv(pl.cdiv(N, min_chunks), _LANE) * _LANE
    tn = int(min(cap, want))
    if tn >= N:
        return N, 1                                  # full-N block (no 128 rule needed)
    return tn, int(pl.cdiv(N, tn))


def _stats_kernel(n_total, tn, tgt_idx_ref, x_ref, t_ref, o_ref):
    # tgt_idx_ref: scalar-prefetch ref, only used by the index_maps.
    del tgt_idx_ref

    x = x_ref[0].astype(jnp.float32)   # logits  (B, tn) — only upcast lives here
    t = t_ref[0].astype(jnp.float32)   # targets (B, tn), bf16 {0,1} -> f32

    if n_total % tn:
        # Last chunk is partial: mask the (possibly garbage) out-of-bounds tail
        # in-kernel instead of materializing a padded copy in HBM.
        base = pl.program_id(0) * tn
        lane = jax.lax.broadcasted_iota(jnp.int32, x.shape, dimension=1)
        valid = (lane + base) < n_total
        vm = valid.astype(jnp.float32)
        x = jnp.where(valid, x, 0.0)   # sanitize before exp/compare (no NaN leaks)
        t = jnp.where(valid, t, 0.0)
    else:
        vm = None

    # Shared transcendental: e = exp(-|x|)
    e = jnp.exp(-jnp.abs(x))
    log1pe = jnp.log1p(e)
    pos = x >= 0.0
    # Numerically stable sigmoid reusing e.
    # TODO(synk): on v7x, `jnp.where(pos, 1.0, e) * pl.reciprocal(1.0 + e, approx=True)`
    # would move the divide onto the spare EUP slot; kept exact here to stay
    # within the 1e-4 self-test tolerance.
    sig = jnp.where(pos, 1.0, e) / (1.0 + e)

    # BCE-with-logits: max(x,0) - x*t + log1p(exp(-|x|))  (pad mask is all-ones).
    bce = jnp.maximum(x, 0.0) - x * t + log1pe

    # Binarization: sigmoid(x) >= 0.5  <=>  x >= 0 (pure VPU compare).
    binz = pos.astype(jnp.float32)
    # For {0,1} targets, bin(t) == t, so the intersection is just t where x>=0.
    inter = jnp.where(pos, t, 0.0)

    if vm is not None:
        bce = bce * vm     # x=0,t=0 on masked lanes would otherwise add log(2)
        sig = sig * vm     # ... and 0.5
        binz = binz * vm   # ... and 1.0

    zeros = jnp.zeros((x.shape[0],), jnp.float32)
    stats = jnp.stack(
        [
            jnp.sum(bce, axis=-1),
            jnp.sum(sig * t, axis=-1),
            jnp.sum(sig, axis=-1),
            jnp.sum(t, axis=-1),
            jnp.sum(inter, axis=-1),
            jnp.sum(binz, axis=-1),
            zeros,
            zeros,
        ],
        axis=-1,
    )  # (B, 8)
    o_ref[0, 0] = stats


def _fused_mask_stats(logits, targets, tgt_idx):
    """Fused per-row reduction statistics for all layers in one pallas_call.

    logits:  (L, B, N)  mask logits in their native dtype (main + aux [+ ref]).
    targets: (T, B, N)  bfloat16 binary targets (gt [+ ref padding]).
    tgt_idx: (L,)       int32, target row used by each layer (scalar prefetch).
    returns: (L, NC, B, 8) float32 chunk-partial statistics.
    """
    L, B, N = logits.shape
    x_bytes = jnp.dtype(logits.dtype).itemsize
    t_bytes = jnp.dtype(targets.dtype).itemsize
    tn, nc = _choose_tile_n(B, N, x_bytes, t_bytes)

    kernel = functools.partial(_stats_kernel, N, tn)

    # Grid = (chunk, layer). Layer is the inner loop so the target block index
    # (tidx[l], 0, c) stays constant across all mask layers sharing gt_spmasks
    # and Pallas skips the re-DMA. Both axes are "parallel" (each grid point
    # writes a distinct output block) so v7x can shard chunks across its 2 TCs.
    return pl.pallas_call(
        kernel,
        out_shape=jax.ShapeDtypeStruct((L, nc, B, _NSTATS), jnp.float32),
        grid_spec=pltpu.PrefetchScalarGridSpec(
            num_scalar_prefetch=1,
            grid=(nc, L),
            in_specs=[
                pl.BlockSpec((1, B, tn), lambda c, l, tidx: (l, 0, c)),
                pl.BlockSpec((1, B, tn), lambda c, l, tidx: (tidx[l], 0, c)),
            ],
            out_specs=pl.BlockSpec((1, 1, B, _NSTATS),
                                   lambda c, l, tidx: (l, c, 0, 0)),
        ),
        compiler_params=pltpu.CompilerParams(
            dimension_semantics=("parallel", "parallel"),
            vmem_limit_bytes=_input_vmem_budget() + (16 << 20),
        ),
    )(tgt_idx, logits, targets)


def _losses_from_stats(stats, pred_scores, n_valid):
    """Tiny scalar glue: combine one layer's (B, 8) statistics into loss terms."""
    bce_sum = stats[:, 0]
    dice_num = stats[:, 1]
    sig_sum = stats[:, 2]
    t_sum = stats[:, 3]
    inter = stats[:, 4]
    binz_sum = stats[:, 5]

    # get_iou (bin(t) == t for binary targets)
    union = t_sum + binz_sum - inter
    tgt_scores = inter / (union + 1e-6)

    # score loss: masked MSE over rows where IoU > 0.5, else 0.0
    score_mask = (tgt_scores > 0.5).astype(jnp.float32)
    mse = (pred_scores - tgt_scores) ** 2
    cnt = jnp.sum(score_mask)
    score_loss = jnp.where(
        cnt > 0, jnp.sum(mse * score_mask) / jnp.maximum(cnt, 1.0), 0.0)

    # mask BCE loss (pad mask all-ones -> per-row mean = row sum / N)
    mask_bce_loss = jnp.mean(bce_sum) / n_valid

    # dice loss
    mask_dice_loss = jnp.mean(1.0 - (2.0 * dice_num + 1.0) / (sig_sum + t_sum + 1.0))

    return score_loss, mask_bce_loss, mask_dice_loss


@functools.partial(jax.jit, static_argnames=("n_mask_layers", "has_ref"))
def _forward_impl(logits, targets, tgt_idx, scores, loss_weight,
                  n_mask_layers, has_ref):
    n_valid = jnp.float32(logits.shape[-1])
    stats = _fused_mask_stats(logits, targets, tgt_idx)   # (L, NC, B, 8)
    stats = jnp.sum(stats, axis=1)                        # chunk-sum -> (L, B, 8)

    loss_out = {}
    loss = jnp.float32(0.0)
    for i in range(n_mask_layers):
        s_loss, b_loss, d_loss = _losses_from_stats(stats[i], scores[i], n_valid)
        loss = loss + (loss_weight[0] * b_loss
                       + loss_weight[1] * d_loss
                       + loss_weight[2] * s_loss)
        prefix = "" if i == 0 else f"layer_{i - 1}_"
        loss_out[prefix + "score_loss"] = s_loss
        loss_out[prefix + "mask_bce_loss"] = b_loss
        loss_out[prefix + "mask_dice_loss"] = d_loss

    if has_ref:
        sample_loss = jnp.mean(stats[n_mask_layers, :, 0]) / n_valid
        loss = loss + loss_weight[3] * sample_loss
        loss_out["sample_loss"] = sample_loss

    loss_out["loss"] = loss
    return loss, loss_out


class Criterion:
    """JAX/Pallas port of the PyTorch `Criterion` module (loss_fun='bce')."""

    def __init__(self, loss_weight=(1.0, 1.0, 1.0, 1.0, 1.0), loss_fun="bce"):
        self.loss_weight = jnp.asarray(loss_weight, dtype=jnp.float32)
        self.loss_fun = loss_fun

    def get_layer_loss(self, layer, aux_outputs, pad_masks, gt_spmasks):
        # TODO(synk): general (non-all-ones) pad_masks are not supported by the
        # fused kernel; the reference forward always constructs all-ones pads.
        del pad_masks
        pred_scores = jnp.squeeze(aux_outputs["scores"])
        pred_masks = jnp.squeeze(aux_outputs["masks"])
        logits = pred_masks[None]                          # native dtype, no upcast
        targets = gt_spmasks.astype(jnp.bfloat16)[None]    # exact for {0,1} masks
        scores = pred_scores[None]
        tgt_idx = jnp.zeros((1,), jnp.int32)
        loss, out = _forward_impl(logits, targets, tgt_idx, scores,
                                  self.loss_weight, n_mask_layers=1, has_ref=False)
        loss_out = {
            f"layer_{layer}_score_loss": out["score_loss"],
            f"layer_{layer}_mask_bce_loss": out["mask_bce_loss"],
            f"layer_{layer}_mask_dice_loss": out["mask_dice_loss"],
        }
        return loss, loss_out

    def __call__(self, pred, gt_spmasks, sp_ref_masks=None):
        pred_scores = jnp.squeeze(pred["scores"])
        pred_masks = jnp.squeeze(pred["masks"])

        # Fuse main + aux layers (+ optional ref path) into one kernel call.
        # TODO(synk): the jnp.stack below costs one extra HBM write+read of the
        # (L,B,N) logits; if the decoder can emit an (L,B,N) all-layer mask
        # tensor natively it can be passed straight to _fused_mask_stats.
        logits_list = [pred_masks]
        scores_list = [pred_scores]
        for aux in pred.get("aux_outputs", []):
            logits_list.append(jnp.squeeze(aux["masks"]))
            scores_list.append(jnp.squeeze(aux["scores"]))
        n_mask_layers = len(logits_list)

        # Targets as bf16 — exact for binary {0,1} masks (soft masks unsupported).
        targets_list = [gt_spmasks.astype(jnp.bfloat16)]
        tgt_idx = [0] * n_mask_layers

        has_ref = sp_ref_masks is not None
        if has_ref:
            if self.loss_fun != "bce":
                # TODO(synk): the 'focal' sp_ref_masks branch is not ported.
                raise NotImplementedError("only loss_fun='bce' is implemented")
            # sp_ref_masks is assumed already padded to (B, N); the
            # pad_sequence glue of the reference is done by the caller.
            logits_list.append(pred["ref_scores"])
            targets_list.append(sp_ref_masks.astype(jnp.bfloat16))
            tgt_idx.append(1)

        # Stream logits in the widest native dtype (no forced f32 upcast).
        stream_dtype = jnp.result_type(*[x.dtype for x in logits_list])
        logits = jnp.stack([x.astype(stream_dtype) for x in logits_list], axis=0)
        targets = jnp.stack(targets_list, axis=0)    # (T, B, N) bf16
        scores = jnp.stack([s.astype(jnp.float32) for s in scores_list], axis=0)
        tgt_idx = jnp.asarray(tgt_idx, jnp.int32)    # (L,)

        return _forward_impl(logits, targets, tgt_idx, scores, self.loss_weight,
                             n_mask_layers=n_mask_layers, has_ref=has_ref)


# ----------------------- pure-JAX reference (for checking) -----------------------

def _ref_layer_losses(pred_masks, pred_scores, gt):
    sig = jax.nn.sigmoid(pred_masks)
    binz = (sig >= 0.5).astype(jnp.float32)
    tbin = (gt > 0.5).astype(jnp.float32)
    inter = jnp.sum(binz * tbin, -1)
    union = jnp.sum(tbin, -1) + jnp.sum(binz, -1) - inter
    iou = inter / (union + 1e-6)
    m = (iou > 0.5).astype(jnp.float32)
    mse = (pred_scores - iou) ** 2
    cnt = jnp.sum(m)
    score_loss = jnp.where(cnt > 0, jnp.sum(mse * m) / jnp.maximum(cnt, 1.0), 0.0)
    bce = (jnp.maximum(pred_masks, 0.0) - pred_masks * gt
           + jnp.log1p(jnp.exp(-jnp.abs(pred_masks))))
    bce_loss = jnp.mean(jnp.mean(bce, -1))
    dice = jnp.mean(1.0 - (2.0 * jnp.sum(sig * gt, -1) + 1.0)
                    / (jnp.sum(sig, -1) + jnp.sum(gt, -1) + 1.0))
    return score_loss, bce_loss, dice


def _ref_total_loss(pred, gt, sp_ref, w):
    s, b, d = _ref_layer_losses(jnp.squeeze(pred["masks"]).astype(jnp.float32),
                                jnp.squeeze(pred["scores"]).astype(jnp.float32), gt)
    loss = w[0] * b + w[1] * d + w[2] * s
    rs = pred["ref_scores"].astype(jnp.float32)
    bce_r = jnp.maximum(rs, 0.0) - rs * sp_ref + jnp.log1p(jnp.exp(-jnp.abs(rs)))
    loss = loss + w[3] * jnp.mean(jnp.mean(bce_r, -1))
    for aux in pred.get("aux_outputs", []):
        s, b, d = _ref_layer_losses(jnp.squeeze(aux["masks"]).astype(jnp.float32),
                                    jnp.squeeze(aux["scores"]).astype(jnp.float32), gt)
        loss = loss + w[0] * b + w[1] * d + w[2] * s
    return loss


def _make_inputs(seed, B, N, n_aux, mask_dtype=jnp.float32):
    keys = jax.random.split(jax.random.PRNGKey(seed), 5 + 2 * n_aux)
    pred = {
        "scores": jax.random.uniform(keys[0], (B, 1), dtype=jnp.float32),
        "masks": (jax.random.normal(keys[1], (B, N), dtype=jnp.float32)
                  * 2.0).astype(mask_dtype),
        "ref_scores": jax.random.normal(keys[2], (B, N),
                                        dtype=jnp.float32).astype(mask_dtype),
        "aux_outputs": [],
    }
    for i in range(n_aux):
        pred["aux_outputs"].append({
            "scores": jax.random.uniform(keys[5 + 2 * i], (B, 1), dtype=jnp.float32),
            "masks": (jax.random.normal(keys[6 + 2 * i], (B, N), dtype=jnp.float32)
                      * 2.0).astype(mask_dtype),
        })
    gt = (jax.random.uniform(keys[3], (B, N)) > 0.5).astype(jnp.float32)
    sp_ref = (jax.random.uniform(keys[4], (B, N)) > 0.5).astype(jnp.float32)
    return pred, gt, sp_ref


def _check(criterion, pred, gt, sp_ref, tag):
    loss, loss_out = criterion(pred, gt, sp_ref_masks=sp_ref)
    loss = jax.block_until_ready(loss)
    jax.block_until_ready(loss_out)
    ref = jax.block_until_ready(
        _ref_total_loss(pred, gt, sp_ref, criterion.loss_weight))
    assert abs(float(loss) - float(ref)) < 1e-4 * max(1.0, abs(float(ref))), (
        tag, float(loss), float(ref))


if __name__ == "__main__":
    criterion = Criterion(loss_weight=[1.0, 1.0, 1.0, 1.0, 1.0], loss_fun="bce")

    # 1) Baseline small f32 case (N divisible by the 128-lane tile).
    pred, gt, sp_ref = _make_inputs(0, B=8, N=256, n_aux=2)
    _check(criterion, pred, gt, sp_ref, "f32_N256")

    # 2) N not a multiple of the tile -> exercises the in-kernel lane masking
    #    that replaced the jnp.pad HBM round-trip.
    pred, gt, sp_ref = _make_inputs(0, B=8, N=320, n_aux=2)
    _check(criterion, pred, gt, sp_ref, "f32_N320_masked_tail")

    # 3) Native-bf16 logits path (half the streamed bytes); reference is
    #    evaluated on the same bf16-rounded values upcast to f32.
    pred, gt, sp_ref = _make_inputs(0, B=8, N=256, n_aux=2, mask_dtype=jnp.bfloat16)
    _check(criterion, pred, gt, sp_ref, "bf16_N256")

    print("KERNEL_OK")
</pallas_src>

<mosaic_0001>
module attributes {stable_mosaic.version = 11 : i64} {
  func.func @_stats_kernel(%arg0: i32, %arg1: i32, %arg2: memref<4xi32, #tpu.memory_space<smem>>, %arg3: memref<1x8x128xf32, #tpu.memory_space<vmem>>, %arg4: memref<1x8x128xbf16, #tpu.memory_space<vmem>>, %arg5: memref<1x1x8x8xf32, #tpu.memory_space<vmem>>) attributes {dimension_semantics = [#tpu.dimension_semantics<parallel>, #tpu.dimension_semantics<parallel>], iteration_bounds = array<i64: 2, 4>, scalar_prefetch = 1 : i64, scratch_operands = 0 : i64, tpu.core_type = #tpu.core_type<tc>, window_params = [{transform_indices = @transform_0, window_bounds = array<i64: 1, 8, 128>}, {transform_indices = @transform_1, window_bounds = array<i64: 1, 8, 128>}, {transform_indices = @transform_2, window_bounds = array<i64: 1, 1, 8, 8>}]} {
    %c0 = arith.constant 0 : index
    %c0_0 = arith.constant 0 : index
    %c0_1 = arith.constant 0 : index
    %0 = vector.load %arg3[%c0, %c0_0, %c0_1] : memref<1x8x128xf32, #tpu.memory_space<vmem>>, vector<1x8x128xf32>
    %1 = vector.shape_cast %0 : vector<1x8x128xf32> to vector<8x128xf32>
    %c0_2 = arith.constant 0 : index
    %c0_3 = arith.constant 0 : index
    %c0_4 = arith.constant 0 : index
    %2 = vector.load %arg4[%c0_2, %c0_3, %c0_4] : memref<1x8x128xbf16, #tpu.memory_space<vmem>>, vector<1x8x128xbf16>
    %3 = vector.shape_cast %2 : vector<1x8x128xbf16> to vector<8x128xbf16>
    %4 = arith.extf %3 : vector<8x128xbf16> to vector<8x128xf32>
    %5 = math.absf %1 : vector<8x128xf32>
    %cst = arith.constant 0.000000e+00 : f32
    %6 = vector.broadcast %cst : f32 to vector<8x128xf32>
    %7 = arith.subf %6, %5 : vector<8x128xf32>
    %8 = math.exp %7 : vector<8x128xf32>
    %9 = math.log1p %8 : vector<8x128xf32>
    %cst_5 = arith.constant 0.000000e+00 : f32
    %10 = vector.broadcast %cst_5 : f32 to vector<8x128xf32>
    %11 = arith.cmpf oge, %1, %10 : vector<8x128xf32>
    %cst_6 = arith.constant 1.000000e+00 : f32
    %12 = vector.broadcast %cst_6 : f32 to vector<8x128xf32>
    %13 = arith.select %11, %12, %8 : vector<8x128xi1>, vector<8x128xf32>
    %cst_7 = arith.constant 1.000000e+00 : f32
    %14 = vector.broadcast %cst_7 : f32 to vector<8x128xf32>
    %15 = arith.addf %14, %8 : vector<8x128xf32>
    %16 = arith.divf %13, %15 : vector<8x128xf32>
    %cst_8 = arith.constant 0.000000e+00 : f32
    %17 = vector.broadcast %cst_8 : f32 to vector<8x128xf32>
    %18 = arith.maximumf %1, %17 : vector<8x128xf32>
    %19 = arith.mulf %1, %4 : vector<8x128xf32>
    %20 = arith.subf %18, %19 : vector<8x128xf32>
    %21 = arith.addf %20, %9 : vector<8x128xf32>
    %22 = arith.extui %11 : vector<8x128xi1> to vector<8x128xi32>
    %23 = arith.sitofp %22 : vector<8x128xi32> to vector<8x128xf32>
    %cst_9 = arith.constant 0.000000e+00 : f32
    %24 = vector.broadcast %cst_9 : f32 to vector<8x128xf32>
    %25 = arith.select %11, %4, %24 : vector<8x128xi1>, vector<8x128xf32>
    %cst_10 = arith.constant 0.000000e+00 : f32
    %26 = vector.broadcast %cst_10 : f32 to vector<8xf32>
    %cst_11 = arith.constant dense<0.000000e+00> : vector<8xf32>
    %27 = vector.multi_reduction <add>, %21, %cst_11 [1] : vector<8x128xf32> to vector<8xf32>
    %28 = arith.mulf %16, %4 : vector<8x128xf32>
    %cst_12 = arith.constant dense<0.000000e+00> : vector<8xf32>
    %29 = vector.multi_reduction <add>, %28, %cst_12 [1] : vector<8x128xf32> to vector<8xf32>
    %cst_13 = arith.constant dense<0.000000e+00> : vector<8xf32>
    %30 = vector.multi_reduction <add>, %16, %cst_13 [1] : vector<8x128xf32> to vector<8xf32>
    %cst_14 = arith.constant dense<0.000000e+00> : vector<8xf32>
    %31 = vector.multi_reduction <add>, %4, %cst_14 [1] : vector<8x128xf32> to vector<8xf32>
    %cst_15 = arith.constant dense<0.000000e+00> : vector<8xf32>
    %32 = vector.multi_reduction <add>, %25, %cst_15 [1] : vector<8x128xf32> to vector<8xf32>
    %cst_16 = arith.constant dense<0.000000e+00> : vector<8xf32>
    %33 = vector.multi_reduction <add>, %23, %cst_16 [1] : vector<8x128xf32> to vector<8xf32>
    %34 = vector.shape_cast %27 : vector<8xf32> to vector<8x1xf32>
    %35 = vector.shape_cast %29 : vector<8xf32> to vector<8x1xf32>
    %36 = vector.shape_cast %30 : vector<8xf32> to vector<8x1xf32>
    %37 = vector.shape_cast %31 : vector<8xf32> to vector<8x1xf32>
    %38 = vector.shape_cast %32 : vector<8xf32> to vector<8x1xf32>
    %39 = vector.shape_cast %33 : vector<8xf32> to vector<8x1xf32>
    %40 = vector.shape_cast %26 : vector<8xf32> to vector<8x1xf32>
    %41 = vector.shape_cast %26 : vector<8xf32> to vector<8x1xf32>
    %42 = tpu.concatenate %34, %35, %36, %37, %38, %39, %40, %41 in 1 : vector<8x1xf32>, vector<8x1xf32>, vector<8x1xf32>, vector<8x1xf32>, vector<8x1xf32>, vector<8x1xf32>, vector<8x1xf32>, vector<8x1xf32> -> vector<8x8xf32>
    %c0_17 = arith.constant 0 : index
    %c0_18 = arith.constant 0 : index
    %c0_19 = arith.constant 0 : index
    %c0_20 = arith.constant 0 : index
    %43 = vector.load %arg5[%c0_17, %c0_18, %c0_19, %c0_20] : memref<1x1x8x8xf32, #tpu.memory_space<vmem>>, vector<1x1x8x8xf32>
    %44 = vector.shape_cast %43 : vector<1x1x8x8xf32> to vector<8x8xf32>
    %45 = vector.shape_cast %42 : vector<8x8xf32> to vector<1x1x8x8xf32>
    tpu.vector_store %arg5[%c0_17, %c0_18, %c0_19, %c0_20], %45 {strides = array<i32>} : memref<1x1x8x8xf32, #tpu.memory_space<vmem>>, vector<1x1x8x8xf32>,
    return
  }
  func.func @transform_0(%arg0: i32, %arg1: i32, %arg2: memref<4xi32, #tpu.memory_space<smem>>) -> (i32, i32, i32) {
    %c0_i32 = arith.constant 0 : i32
    %c0_i32_0 = arith.constant 0 : i32
    return %arg1, %c0_i32, %arg0 : i32, i32, i32
  }
  func.func @transform_1(%arg0: i32, %arg1: i32, %arg2: memref<4xi32, #tpu.memory_space<smem>>) -> (i32, i32, i32) {
    %0 = arith.index_cast %arg1 : i32 to index
    %1 = memref.load %arg2[%0] : memref<4xi32, #tpu.memory_space<smem>>
    %c0_i32 = arith.constant 0 : i32
    %c0_i32_0 = arith.constant 0 : i32
    return %1, %c0_i32, %arg0 : i32, i32, i32
  }
  func.func @transform_2(%arg0: i32, %arg1: i32, %arg2: memref<4xi32, #tpu.memory_space<smem>>) -> (i32, i32, i32, i32) {
    %c0_i32 = arith.constant 0 : i32
    %c0_i32_0 = arith.constant 0 : i32
    %c0_i32_1 = arith.constant 0 : i32
    return %arg1, %arg0, %c0_i32, %c0_i32_0 : i32, i32, i32, i32
  }
}

</mosaic_0001>

<llo_original>
// kernel: _forward_impl.1
$region0: #{_forward_impl.1}
  #allocation0 [shape = 'u32[]', space=smem, size = 0x4, offset = 0x4, fixed_abs, tag = 'smem constant byte address 0x4 - core index']
  #allocation1 [shape = 'u32[144,128]{1,0:T(1,128)}', space=vmem, size = 0x12000, scoped, tag = 'internal scratch']
  #allocation2 [shape = 's32[1]{0}', space=sflag, size = 0x4, scoped, tag = 'scoped memory for _forward_impl.1']
  #allocation3 [shape = 'u8[512]{0}', space=smem, size = 0x200, scoped, tag = 'prefetched SMEM operand 0']
  %s0 = inlined_call_operand.vmem [shape: s32[4], index: 0, kind: input, shape index: {}]
  %s1 = inlined_call_operand.hbm [shape: f32[4,8,256], index: 1, kind: input, shape index: {}]
  %s2 = inlined_call_operand.hbm [shape: bf16[2,8,256], index: 2, kind: input, shape index: {}]
  %s3 = inlined_call_operand.vmem [shape: f32[4,2,8,8], index: 3, kind: output, shape index: {}]
  %s4 = sld [smem:[#allocation0]]
  $region49: #{_forward_impl.1} parent=0
    _
  %s6 = ssub.s32 1, %s4
  %s7 = scalar_select 0, %s6, %s4
  %s8 = sshll.u32 %s0, 4
  %s9 = int_to_ptr.vmem [resolvable:$true] %s8
  %11 = dma.vmem_to_smem %s9, 16, [#allocation3], [#allocation2]
  %12 = dma.done [#allocation2], 16
  %13 = sfence
  $region1: #{_forward_impl.1} parent=0
    #allocation4 [shape = 'u8[8192]{0}', space=vmem, size = 0x2000, scoped, tag = 'input window, operand 1']
    #allocation5 [shape = 's32[2]{0}', space=sflag, size = 0x8, scoped, tag = 'scoped memory for _forward_impl.1']
    #allocation6 [shape = 'u8[4096]{0}', space=vmem, size = 0x1000, scoped, tag = 'input window, operand 2']
    #allocation7 [shape = 's32[2]{0}', space=sflag, size = 0x8, scoped, tag = 'scoped memory for _forward_impl.1']
    %14 = vsyncpa [#allocation5], 0
    %s15 = scalar_lea.sflag [#allocation5], 1
    %16 = vsyncpa %s15, 0
    %17 = vsyncpa [#allocation7], 0
    %s18 = scalar_lea.sflag [#allocation7], 1
    %19 = vsyncpa %s18, 0
    loop: start=0, step=1, limit=10
    $region2: #{_forward_impl.1} parent=1 // loop_pre_header
      _
    $region3: #{_forward_impl.1} parent=1 // loop_header
      %s21 = sphi 0, %s25
      %p22 = scmp.ge.s32.totalorder %s21, 10
      %s28 = sphi 0, %s40
      %s29 = sphi 0, %s36
      %s30 = sphi 0, %s28
      %s31 = sphi 0, %s29
      %s32 = sphi 0, %s30
      %s33 = sphi 0, %s31
      %s45 = sphi 0, %s47
      %s48 = sphi 0, %s45
      %s49 = sphi 0, %s48
      %s65 = sphi 0, %s49
      %s75 = sphi 0, %s77
      %s78 = sphi 0, %s75
      %s79 = sphi 0, %s78
      %s95 = sphi 0, %s79
      %s103 = sphi 0, %s105
      %s106 = sphi 0, %s103
      %s107 = sphi 0, %s106
      %s123 = sphi 0, %s107
    $region4: #{_forward_impl.1} parent=1 // loop_header_branch
      %24 = sbr.rel (%p22) target = $region8
    $region5: #{_forward_impl.1} parent=1 // loop_body
      %s26 = ssub.s32 %s21, 1
      %s27 = ssub.s32 %s21, 2
      %s34 = sadd.s32 1, %s29
      %p35 = scmp.ge.s32.totalorder %s34, 4
      %s36 = scalar_select %p35, 0, %s34
      %s37 = sadd.s32 1, %s28
      %s38 = scalar_select %p35, %s37, %s28
      %p39 = scmp.ge.s32.totalorder %s38, 2
      %s40 = scalar_select %p39, 0, %s38
      %s41 = ssub.s32 %s29, %s36
      %s42 = ssub.s32 %s28, %s40
      %s43 = sor.u32 %s41, %s42
      %p44 = scmp.eq.s32.totalorder %s43, 0
      %s46 = sadd.s32 %s45, 1
      %s47 = scalar_select %p44, %s45, %s46
      %p50 = pneg %p44
      %p51 = scmp.eq.s32.totalorder %s21, 7
      %p52 = por %p50, %p51
      %p53 = scmp.ne.s32.totalorder %s45, %s48
      %p54 = scmp.eq.s32.totalorder %s21, 0
      %p55 = por %p53, %p54
      %p56 = scmp.ne.s32.totalorder %s45, %s48
      %p57 = scmp.eq.s32.totalorder %s26, 7
      %p58 = por %p56, %p57
      %p59 = scmp.ne.s32.totalorder %s48, %s49
      %p60 = scmp.eq.s32.totalorder %s26, 0
      %p61 = por %p59, %p60
      %p62 = scmp.ne.s32.totalorder %s48, %s49
      %p63 = scmp.eq.s32.totalorder %s27, 7
      %p64 = por %p62, %p63
      %p66 = scmp.ne.s32.totalorder %s49, %s65
      %p67 = scmp.eq.s32.totalorder %s27, 0
      %p68 = por %p66, %p67
      %s69 = sld [smem:[#allocation3 + %s29]]
      %s70 = sld [smem:[#allocation3 + %s36]]
      %s71 = ssub.s32 %s69, %s70
      %s72 = ssub.s32 %s28, %s40
      %s73 = sor.u32 %s71, %s72
      %p74 = scmp.eq.s32.totalorder %s73, 0
      %s76 = sadd.s32 %s75, 1
      %s77 = scalar_select %p74, %s75, %s76
      %p80 = pneg %p74
      %p81 = scmp.eq.s32.totalorder %s21, 7
      %p82 = por %p80, %p81
      %p83 = scmp.ne.s32.totalorder %s75, %s78
      %p84 = scmp.eq.s32.totalorder %s21, 0
      %p85 = por %p83, %p84
      %p86 = scmp.ne.s32.totalorder %s75, %s78
      %p87 = scmp.eq.s32.totalorder %s26, 7
      %p88 = por %p86, %p87
      %p89 = scmp.ne.s32.totalorder %s78, %s79
      %p90 = scmp.eq.s32.totalorder %s26, 0
      %p91 = por %p89, %p90
      %p92 = scmp.ne.s32.totalorder %s78, %s79
      %p93 = scmp.eq.s32.totalorder %s27, 7
      %p94 = por %p92, %p93
      %p96 = scmp.ne.s32.totalorder %s79, %s95
      %p97 = scmp.eq.s32.totalorder %s27, 0
      %p98 = por %p96, %p97
      %s99 = ssub.s32 %s29, %s36
      %s100 = ssub.s32 %s28, %s40
      %s101 = sor.u32 %s99, %s100
      %p102 = scmp.eq.s32.totalorder %s101, 0
      %s104 = sadd.s32 %s103, 1
      %s105 = scalar_select %p102, %s103, %s104
      %p108 = pneg %p102
      %p109 = scmp.eq.s32.totalorder %s21, 7
      %p110 = por %p108, %p109
      %p111 = scmp.ne.s32.totalorder %s103, %s106
      %p112 = scmp.eq.s32.totalorder %s21, 0
      %p113 = por %p111, %p112
      %p114 = scmp.ne.s32.totalorder %s103, %s106
      %p115 = scmp.eq.s32.totalorder %s26, 7
      %p116 = por %p114, %p115
      %p117 = scmp.ne.s32.totalorder %s106, %s107
      %p118 = scmp.eq.s32.totalorder %s26, 0
      %p119 = por %p117, %p118
      %p120 = scmp.ne.s32.totalorder %s106, %s107
      %p121 = scmp.eq.s32.totalorder %s27, 7
      %p122 = por %p120, %p121
      %p124 = scmp.ne.s32.totalorder %s107, %s123
      %p125 = scmp.eq.s32.totalorder %s27, 0
      %p126 = por %p124, %p125
      %p127 = scmp.le.s32.totalorder 1, %s21
      %p128 = scmp.lt.s32.totalorder %s21, 9
      %p129 = pnand %p127, %p128
      %p130 = pneg %p129
      // Predicated region
      $region9: #{_forward_impl.1} parent=5 // pred_check
        _
      $region10: #{_forward_impl.1} parent=5 // pred_check_branch
        %132 = sbr.rel (%p129) target = $region12
      $region11: #{_forward_impl.1} parent=5 // pred_region
        %s133 = ssub.s32 %s21, 1
      $region12: #{_forward_impl.1} parent=5 // pred_fallthru
        _
      %p134 = scmp.lt.s32.totalorder %s21, 8
      // Predicated region
      $region13: #{_forward_impl.1} parent=5 // pred_check
        %p135 = pneg %p134
      $region14: #{_forward_impl.1} parent=5 // pred_check_branch
        %137 = sbr.rel (%p135) target = $region16
      $region15: #{_forward_impl.1} parent=5 // pred_region
        // Predicated region
        $region17: #{_forward_impl.1} parent=15 // pred_check
          %p138 = pneg %p55
        $region18: #{_forward_impl.1} parent=15 // pred_check_branch
          %140 = sbr.rel (%p138) target = $region20
        $region19: #{_forward_impl.1} parent=15 // pred_region
          %s141 = sand.u32 %s45, 1
          %s142 = scalar_lea.sflag [#allocation5], %s141
          %s143 = sand.u32 %s45, 1
          %s144 = smul.addr %s143, 8
          %s145 = scalar_lea.vmem [#allocation4], %s144
          %s147 = ssub.s32 128, 128
          %148 = vsyncadd %s142, %s147
          %s149 = smul.addr %s29, 2
          %s150 = sadd.s32 %s28, %s149
          %s151 = smul.addr %s150, 128
          %s152 = scalar_lea.hbm %s1, %s151
          %s154 = sshll.u32 %s145, 4
          %s155 = int_to_ptr.vmem [resolvable:$true] %s154
          %157 = dma.hbm_to_vmem [thread:$0]  %s152, 128, %s155, %s142
        $region20: #{_forward_impl.1} parent=15 // pred_fallthru
          _
        // Predicated region
        $region21: #{_forward_impl.1} parent=15 // pred_check
          %p158 = pneg %p85
        $region22: #{_forward_impl.1} parent=15 // pred_check_branch
          %160 = sbr.rel (%p158) target = $region24
        $region23: #{_forward_impl.1} parent=15 // pred_region
          %s161 = sand.u32 %s75, 1
          %s162 = scalar_lea.sflag [#allocation7], %s161
          %s163 = sand.u32 %s75, 1
          %s164 = smul.addr %s163, 4
          %s165 = scalar_lea.vmem [#allocation6], %s164
          %s166 = sld [smem:[#allocation3 + %s29]]
          %s168 = ssub.s32 64, 64
          %169 = vsyncadd %s162, %s168
          %s170 = smul.addr %s166, 2
          %s171 = sadd.s32 %s28, %s170
          %s172 = smul.addr %s171, 64
          %s173 = scalar_lea.hbm %s2, %s172
          %s175 = sshll.u32 %s165, 4
          %s176 = int_to_ptr.vmem [resolvable:$true] %s175
          %178 = dma.hbm_to_vmem [thread:$0]  %s173, 64, %s176, %s162
        $region24: #{_forward_impl.1} parent=15 // pred_fallthru
          _
      $region16: #{_forward_impl.1} parent=5 // pred_fallthru
        _
      %p179 = scmp.le.s32.totalorder 1, %s21
      %p180 = scmp.lt.s32.totalorder %s21, 9
      %p181 = pnand %p179, %p180
      %p182 = pneg %p181
      // Predicated region
      $region25: #{_forward_impl.1} parent=5 // pred_check
        _
      $region26: #{_forward_impl.1} parent=5 // pred_check_branch
        %184 = sbr.rel (%p181) target = $region28
      $region27: #{_forward_impl.1} parent=5 // pred_region
        %s185 = ssub.s32 %s21, 1
        %s186 = sand.u32 %s48, 1
        %s187 = scalar_lea.sflag [#allocation5], %s186
        %s188 = sand.u32 %s48, 1
        %s189 = smul.addr %s188, 8
        %s190 = scalar_lea.vmem [#allocation4], %s189
        // Predicated region
        $region29: #{_forward_impl.1} parent=27 // pred_check
          %p191 = pneg %p61
        $region30: #{_forward_impl.1} parent=27 // pred_check_branch
          %193 = sbr.rel (%p191) target = $region32
        $region31: #{_forward_impl.1} parent=27 // pred_region
          %194 = dma.done %s187, 128
        $region32: #{_forward_impl.1} parent=27 // pred_fallthru
          _
        %s195 = sand.u32 %s78, 1
        %s196 = scalar_lea.sflag [#allocation7], %s195
        %s197 = sand.u32 %s78, 1
        %s198 = smul.addr %s197, 4
        %s199 = scalar_lea.vmem [#allocation6], %s198
        // Predicated region
        $region33: #{_forward_impl.1} parent=27 // pred_check
          %p200 = pneg %p91
        $region34: #{_forward_impl.1} parent=27 // pred_check_branch
          %202 = sbr.rel (%p200) target = $region36
        $region35: #{_forward_impl.1} parent=27 // pred_region
          %203 = dma.done %s196, 64
        $region36: #{_forward_impl.1} parent=27 // pred_fallthru
          _
        %s204 = sand.u32 %s48, 1
        %s205 = scalar_lea.sflag [#allocation5], %s204
        %s206 = sand.u32 %s48, 1
        %s207 = smul.addr %s206, 8
        %s208 = scalar_lea.vmem [#allocation4], %s207
        %p209 = pneg %p61
        %p210 = pneg %p58
        %s211 = sand.u32 %s78, 1
        %s212 = scalar_lea.sflag [#allocation7], %s211
        %s213 = sand.u32 %s78, 1
        %s214 = smul.addr %s213, 4
        %s215 = scalar_lea.vmem [#allocation6], %s214
        %p216 = pneg %p91
        %p217 = pneg %p88
        %p218 = pneg %p119
        %p219 = pneg %p116
        %p220 = scmp.lt.s32.totalorder %s31, 3
        %s221 = scalar_select %p220, %s31, 3
        %p222 = scmp.lt.s32.totalorder %s30, 1
        %s223 = scalar_select %p222, %s30, 1
        %s224 = smul.addr %s221, 2
        %s225 = sadd.s32 %s223, %s224
        %s226 = smul.addr %s225, 8
        %s227 = scalar_lea.vmem %s3, %s226
        %s228 = sld [smem:[#allocation3 + %s31]]
        %p229 = scmp.lt.s32.totalorder %s31, 3
        %s230 = scalar_select %p229, %s31, 3
        %p231 = scmp.lt.s32.totalorder %s30, 1
        %s232 = scalar_select %p231, %s30, 1
        %s233 = smul.addr %s230, 2
        %s234 = sadd.s32 %s232, %s233
        %s235 = smul.addr %s234, 8
        %s236 = scalar_lea.vmem %s3, %s235
        %v237 = vld [vmem:[%s190] sm:$0xff]
        %v238 = vld [vmem:[%s199] sm:$0xf]
        %v239 = vunpack.c.l.bf16 %v238
        %v240 = vand.u32 2147483647, %v237
        %v241 = vsub.f32 0.0, %v240
        %v242 = vmul.f32 %v241, 1.442695
        %v243 = vpow.pop %v242
        %v244 = vadd.f32 %v243, 1.0
        %v245 = vlog2.pop %v244
        %v246 = vmul.f32 %v245, 0.6931472
        %v247 = vmul.f32 -0.5, %v243
        %v248 = vadd.f32 %v247, 1.0
        %v249 = vmul.f32 %v248, %v243
        %v250 = vand.u32 2147483647, %v243
        %vm251 = vcmp.lt.f32.partialorder %v250, 0.0004427343
        %v252 = vsel %vm251, %v249, %v246
        %vm253 = vcmp.ge.f32.partialorder %v237, 0.0
        %v254 = vsel %vm253, 1.0, %v243
        %v255 = vadd.f32 %v243, 1.0
        %v256 = vrcp.pop %v255
        %v257 = vmul.f32 %v254, %v256
        %v258 = vmax.f32 %v237, 0.0
        %v259 = vmul.f32 %v237, %v239
        %v260 = vsub.f32 %v258, %v259
        %v261 = vadd.f32 %v260, %v252
        %v262 = vsel %vm253, 1, 0
        %v263 = vcvt.s32.f32 %v262
        %v264 = vsel %vm253, %v239, 0.0
        %265 = vadd.xlane.f32.xlu0 %v261
        %v266 = vpop.xlane.xlu0 %265
        %v267 = vmul.f32 %v257, %v239
        %268 = vadd.xlane.f32.xlu0 %v267
        %v269 = vpop.xlane.xlu0 %268
        %270 = vadd.xlane.f32.xlu0 %v257
        %v271 = vpop.xlane.xlu0 %270
        %272 = vadd.xlane.f32.xlu0 %v239
        %v273 = vpop.xlane.xlu0 %272
        %274 = vadd.xlane.f32.xlu0 %v264
        %v275 = vpop.xlane.xlu0 %274
        %276 = vadd.xlane.f32.xlu0 %v263
        %v277 = vpop.xlane.xlu0 %276
        %vm278 = vcmask 7168
        %v279 = vsel %vm278, %v266, %v269
        %vm280 = vcmask 15360
        %v281 = vsel %vm280, %v279, %v271
        %vm282 = vcmask 23552
        %v283 = vsel %vm282, %v281, %v273
        %vm284 = vcmask 31744
        %v285 = vsel %vm284, %v283, %v275
        %vm286 = vcmask 39936
        %v287 = vsel %vm286, %v285, %v277
        %vm288 = vcmask 48128
        %v289 = vsel %vm288, %v287, 0.0
        %vm290 = vcmask 56320
        %v291 = vsel %vm290, %v289, 0.0
        %vm292 = vcmask 64512
        %293 = vst.msk [vmem:[%s236] sm:$0xff] %vm292, %v291
        %p294 = scmp.lt.s32.totalorder %s31, 3
        %s295 = scalar_select %p294, %s31, 3
        %p296 = scmp.lt.s32.totalorder %s30, 1
        %s297 = scalar_select %p296, %s30, 1
        %s298 = smul.addr %s295, 2
        %s299 = sadd.s32 %s297, %s298
        %s300 = smul.addr %s299, 8
        %s301 = scalar_lea.vmem %s3, %s300
        // Predicated region
        $region37: #{_forward_impl.1} parent=27 // pred_check
          %p302 = pneg %p116
        $region38: #{_forward_impl.1} parent=27 // pred_check_branch
          %304 = sbr.rel (%p302) target = $region40
        $region39: #{_forward_impl.1} parent=27 // pred_region
          _
        $region40: #{_forward_impl.1} parent=27 // pred_fallthru
          _
      $region28: #{_forward_impl.1} parent=5 // pred_fallthru
        _
      %p305 = scmp.le.s32.totalorder 2, %s21
      // Predicated region
      $region41: #{_forward_impl.1} parent=5 // pred_check
        %p306 = pneg %p305
      $region42: #{_forward_impl.1} parent=5 // pred_check_branch
        %308 = sbr.rel (%p306) target = $region44
      $region43: #{_forward_impl.1} parent=5 // pred_region
        %s309 = ssub.s32 %s21, 2
        // Predicated region
        $region45: #{_forward_impl.1} parent=43 // pred_check
          %p310 = pneg %p122
        $region46: #{_forward_impl.1} parent=43 // pred_check_branch
          %312 = sbr.rel (%p310) target = $region48
        $region47: #{_forward_impl.1} parent=43 // pred_region
          %p313 = scmp.lt.s32.totalorder %s33, 3
          %s314 = scalar_select %p313, %s33, 3
          %p315 = scmp.lt.s32.totalorder %s32, 1
          %s316 = scalar_select %p315, %s32, 1
          %s317 = smul.addr %s314, 2
          %s318 = sadd.s32 %s316, %s317
          %s319 = smul.addr %s318, 8
          %s320 = scalar_lea.vmem %s3, %s319
        $region48: #{_forward_impl.1} parent=43 // pred_fallthru
          _
      $region44: #{_forward_impl.1} parent=5 // pred_fallthru
        _
    $region6: #{_forward_impl.1} parent=1 // loop_footer
      %s25 = sadd.s32 1, %s21
    $region7: #{_forward_impl.1} parent=1 // loop_footer_branch
      %20 = sbr.rel target = $region3
    $region8: #{_forward_impl.1} parent=1 // loop_exit
      _
    %321 = vsyncpa [#allocation5], 1
    %s322 = scalar_lea.sflag [#allocation5], 1
    %323 = vsyncpa %s322, 1
    %324 = vsyncpa [#allocation7], 1
    %s325 = scalar_lea.sflag [#allocation7], 1
    %326 = vsyncpa %s325, 1

</llo_original>
